<compile_context>
chip_gen: v5e
topology: v5e:2x2
jax: 0.10.0
libtpu: 0.0.40
codegen_flags: <defaults>
</compile_context>

<pallas_src>
import jax
import jax.numpy as jnp
from jax.experimental import pallas as pl
from jax.experimental.pallas import tpu as pltpu

_LANE_CANDIDATES = (1024, 512, 256, 128)    # lane-dense last-dim choices
_TILE_BYTES_TARGET = 4 << 20                # ~4 MiB tiles: >95% per-step overhead amortization
_VMEM_LIMIT_BYTES = 32 * 1024 * 1024        # footprint (<=16 MiB) << limit on v5e/v6e/v7x
_SMALL_ELEMS = 64 * 1024                    # below this, plain XLA wins (launch+DMA overhead)
_MIN_GRID_STEPS = 8                         # keep >=~4 pipelined steps per TC on v7x megacore
_SUBLANE_GRANULE = {4: 8, 2: 16, 1: 32}     # packed sublane granule per dtype itemsize


def _round_up(x, m):
    return -(-x // m) * m


def _scale_add_kernel(w1_ref, w2_ref, x_ref, o_ref):
    # w1_ref / w2_ref: (1,) scalars in SMEM (scalar prefetch).
    # x_ref / o_ref: (tile_rows, lane) VMEM tiles.
    w = w1_ref[0] + w2_ref[0]                            # scalar ALU — free
    o_ref[...] = (w * x_ref[...]).astype(o_ref.dtype)    # VPU elementwise, mem-bound


def _pallas_scaled_copy(w1, w2, x2d, tile_rows, donate):
    rows, lane = x2d.shape
    grid = (pl.cdiv(rows, tile_rows),)
    grid_spec = pltpu.PrefetchScalarGridSpec(
        num_scalar_prefetch=2,                            # w1, w2 -> SMEM
        grid=grid,
        in_specs=[
            pl.BlockSpec((tile_rows, lane), lambda i, w1s, w2s: (i, 0)),
        ],
        out_specs=pl.BlockSpec((tile_rows, lane), lambda i, w1s, w2s: (i, 0)),
    )
    return pl.pallas_call(
        _scale_add_kernel,
        out_shape=jax.ShapeDtypeStruct((rows, lane), x2d.dtype),
        grid_spec=grid_spec,
        compiler_params=pltpu.CompilerParams(
            dimension_semantics=("parallel",),            # megacore sharding on v7x
            vmem_limit_bytes=_VMEM_LIMIT_BYTES,
        ),
        # x2d is operand index 2 (the two scalar-prefetch args precede it); alias
        # it to output 0 so the caller can donate batch['input'].
        input_output_aliases={2: 0} if donate else {},
    )(w1, w2, x2d)


def _compute_tile_rows(rows, lane, itemsize):
    """Dtype-aware tile sizing: ~_TILE_BYTES_TARGET tiles, sublane-granule aligned,
    clamped so large inputs keep >= _MIN_GRID_STEPS grid steps (v7x megacore)."""
    granule = _SUBLANE_GRANULE.get(itemsize, 8)
    target = max(granule, (_TILE_BYTES_TARGET // (lane * itemsize)) // granule * granule)
    per_step = _round_up(-(-rows // _MIN_GRID_STEPS), granule)
    tile_rows = max(granule, min(target, per_step))
    if tile_rows >= rows:
        return rows                 # single full-extent block (always legal, tiny input)
    return tile_rows                # multiple of granule; last partial block is masked


def _scaled_by_sum(w1, w2, x, *, force_pallas=False, donate=False):
    """Compute (w1 + w2) * x, dispatching to the Pallas kernel for large inputs."""
    total = x.size
    lane = next((l for l in _LANE_CANDIDATES if total % l == 0), None)

    if lane is None or (total < _SMALL_ELEMS and not force_pallas):
        # TODO(synk): large lane-unfriendly totals could be padded to a multiple of
        # 128 to stay on the Pallas path; XLA's fused elementwise is near-roofline
        # for this op, so the fallback is accepted consciously.
        return (w1[0] + w2[0]) * x

    rows = total // lane
    x2d = x.reshape(rows, lane)                           # lane-dense slab
    tile_rows = _compute_tile_rows(rows, lane, x2d.dtype.itemsize)
    out2d = _pallas_scaled_copy(w1, w2, x2d, tile_rows, donate)
    return out2d.reshape(x.shape)


def part_not_trained_forward(w1, w2, batch, *, force_pallas=False, donate=False):
    """JAX/Pallas equivalent of PartNotTrainedModel.forward.

    Returns {'regression': {'output': (w1+w2)*input, 'output_truth': batch['output']}}
    mirroring the OutputRegression container.
    """
    out = _scaled_by_sum(w1, w2, batch["input"], force_pallas=force_pallas, donate=donate)
    return {"regression": {"output": out, "output_truth": batch["output"]}}


if __name__ == "__main__":
    key = jax.random.PRNGKey(0)
    k_w1, k_w2, k_a, k_b, k_c, k_d = jax.random.split(key, 6)

    # Parameters: nn.Parameter(torch.zeros(1)) each.  torch init is zeros
    # (degenerate); use deterministic nonzero values so compute is exercised.
    w1 = jax.random.normal(k_w1, (1,), dtype=jnp.float32)
    w2 = jax.random.normal(k_w2, (1,), dtype=jnp.float32)

    # 1) Tiny trw-test-like shape — auto-dispatch takes the plain-XLA path.
    small = {
        "input": jax.random.normal(k_a, (8, 128), dtype=jnp.float32),
        "output": jax.random.normal(k_b, (8, 128), dtype=jnp.float32),
    }
    res_small = part_not_trained_forward(w1, w2, small)
    out_small = jax.block_until_ready(res_small["regression"]["output"])
    ref_small = (w1[0] + w2[0]) * small["input"]
    assert out_small.shape == small["input"].shape
    assert jnp.allclose(out_small, ref_small, atol=1e-6, rtol=1e-6)

    # 2) Moderate f32 shape on the Pallas path, with input/output aliasing:
    #    (512, 256) f32 -> (128, 1024) slab; min-grid clamp gives tile_rows=16,
    #    grid=(8,) so both v7x cores keep pipelined, double-buffered steps.
    big_in = jax.random.normal(k_c, (512, 256), dtype=jnp.float32)
    big = {"input": big_in,
           "output": jax.random.normal(k_d, (512, 256), dtype=jnp.float32)}
    ref_big = (w1[0] + w2[0]) * big_in
    res_big = part_not_trained_forward(w1, w2, big, donate=True)
    out_big = jax.block_until_ready(res_big["regression"]["output"])
    assert out_big.shape == big_in.shape and out_big.dtype == jnp.float32
    assert jnp.allclose(out_big, ref_big, atol=1e-6, rtol=1e-6)

    # 3) bf16 input exercising dtype-aware tile math (granule=16 sublanes).
    bf_in = jax.random.normal(k_c, (256, 512), dtype=jnp.float32).astype(jnp.bfloat16)
    bf = {"input": bf_in, "output": jnp.zeros_like(bf_in)}
    res_bf = part_not_trained_forward(w1, w2, bf, force_pallas=True)
    out_bf = jax.block_until_ready(res_bf["regression"]["output"])
    ref_bf = ((w1[0] + w2[0]) * bf_in.astype(jnp.float32)).astype(jnp.bfloat16)
    assert out_bf.shape == bf_in.shape and out_bf.dtype == jnp.bfloat16
    assert jnp.allclose(out_bf.astype(jnp.float32), ref_bf.astype(jnp.float32),
                        atol=3e-2, rtol=3e-2)

    print("KERNEL_OK")
</pallas_src>

<mosaic_0001>
module attributes {stable_mosaic.version = 11 : i64} {
  func.func @_scale_add_kernel(%arg0: i32, %arg1: memref<1xf32, #tpu.memory_space<smem>>, %arg2: memref<1xf32, #tpu.memory_space<smem>>, %arg3: memref<16x1024xf32, #tpu.memory_space<vmem>>, %arg4: memref<16x1024xf32, #tpu.memory_space<vmem>>) attributes {dimension_semantics = [#tpu.dimension_semantics<parallel>], iteration_bounds = array<i64: 8>, scalar_prefetch = 2 : i64, scratch_operands = 0 : i64, tpu.core_type = #tpu.core_type<tc>, window_params = [{transform_indices = @transform_0, window_bounds = array<i64: 16, 1024>}, {transform_indices = @transform_1, window_bounds = array<i64: 16, 1024>}]} {
    %c0 = arith.constant 0 : index
    %0 = memref.load %arg1[%c0] : memref<1xf32, #tpu.memory_space<smem>>
    %c0_0 = arith.constant 0 : index
    %1 = memref.load %arg2[%c0_0] : memref<1xf32, #tpu.memory_space<smem>>
    %2 = arith.addf %0, %1 : f32
    %c0_1 = arith.constant 0 : index
    %c0_2 = arith.constant 0 : index
    %3 = vector.load %arg3[%c0_1, %c0_2] : memref<16x1024xf32, #tpu.memory_space<vmem>>, vector<16x1024xf32>
    %4 = vector.broadcast %2 : f32 to vector<16x1024xf32>
    %5 = arith.mulf %4, %3 : vector<16x1024xf32>
    %c0_3 = arith.constant 0 : index
    %c0_4 = arith.constant 0 : index
    %6 = vector.load %arg4[%c0_3, %c0_4] : memref<16x1024xf32, #tpu.memory_space<vmem>>, vector<16x1024xf32>
    tpu.vector_store %arg4[%c0_3, %c0_4], %5 {strides = array<i32>} : memref<16x1024xf32, #tpu.memory_space<vmem>>, vector<16x1024xf32>,
    return
  }
  func.func @transform_0(%arg0: i32, %arg1: memref<1xf32, #tpu.memory_space<smem>>, %arg2: memref<1xf32, #tpu.memory_space<smem>>) -> (i32, i32) {
    %c0_i32 = arith.constant 0 : i32
    %c0_i32_0 = arith.constant 0 : i32
    return %arg0, %c0_i32 : i32, i32
  }
  func.func @transform_1(%arg0: i32, %arg1: memref<1xf32, #tpu.memory_space<smem>>, %arg2: memref<1xf32, #tpu.memory_space<smem>>) -> (i32, i32) {
    %c0_i32 = arith.constant 0 : i32
    %c0_i32_0 = arith.constant 0 : i32
    return %arg0, %c0_i32 : i32, i32
  }
}

</mosaic_0001>

<llo_original>
// kernel: tpu_custom_call.1
$region0: #{tpu_custom_call.1}
  #allocation0 [shape = 'u32[]', space=smem, size = 0x4, offset = 0x4, fixed_abs, tag = 'smem constant byte address 0x4 - core index']
  #allocation1 [shape = 'u32[72,128]{1,0:T(1,128)}', space=vmem, size = 0x9000, scoped, tag = 'internal scratch']
  #allocation2 [shape = 's32[1]{0}', space=sflag, size = 0x4, scoped, tag = 'scoped memory for tpu_custom_call.1']
  #allocation3 [shape = 'f32[1]{0:T(128)S(6)}', space=smem, size = 0x200, scoped, tag = 'prefetched SMEM operand 0']
  #allocation4 [shape = 'f32[1]{0:T(128)S(6)}', space=smem, size = 0x200, scoped, tag = 'prefetched SMEM operand 1']
  %s0 = inlined_call_operand.<no memory space> [shape: f32[1], index: 0, kind: input, shape index: {}]
  %s1 = inlined_call_operand.<no memory space> [shape: f32[1], index: 1, kind: input, shape index: {}]
  %s2 = inlined_call_operand.hbm [shape: f32[128,1024], index: 2, kind: input, shape index: {}, may-alias: {2,3}]
  %s3 = inlined_call_operand.hbm [shape: f32[128,1024], index: 3, kind: output, shape index: {}, may-alias: {2,3}]
  %s4 = sld [smem:[#allocation0]]
  $region41: #{tpu_custom_call.1} parent=0
    _
  %s6 = ssub.s32 1, %s4
  %s7 = scalar_select 0, %s6, %s4
  %8 = sst [smem:[#allocation3]] %s0
  %9 = sst [smem:[#allocation4]] %s1
  $region1: #{tpu_custom_call.1} parent=0
    #allocation5 [shape = 'u8[131072]{0}', space=vmem, size = 0x20000, scoped, tag = 'input window, operand 2']
    #allocation6 [shape = 's32[2]{0}', space=sflag, size = 0x8, scoped, tag = 'scoped memory for tpu_custom_call.1']
    #allocation7 [shape = 's32[2]{0}', space=sflag, size = 0x8, scoped, tag = 'scoped memory for tpu_custom_call.1']
    #allocation8 [shape = 'u8[131072]{0}', space=vmem, size = 0x20000, scoped, tag = 'output window, operand 0']
    %10 = vsyncpa [#allocation6], 0
    %s11 = scalar_lea.sflag [#allocation6], 1
    %12 = vsyncpa %s11, 0
    %13 = vsyncpa [#allocation7], 0
    %s14 = scalar_lea.sflag [#allocation7], 1
    %15 = vsyncpa %s14, 0
    loop: start=0, step=1, limit=10
    $region2: #{tpu_custom_call.1} parent=1 // loop_pre_header
      _
    $region3: #{tpu_custom_call.1} parent=1 // loop_header
      %s17 = sphi 0, %s21
      %p18 = scmp.ge.s32.totalorder %s17, 10
      %s27 = sphi 0, %s29
      %s30 = sphi 0, %s27
      %s31 = sphi 0, %s30
      %s47 = sphi 0, %s31
      %s53 = sphi 0, %s55
      %s56 = sphi 0, %s53
      %s57 = sphi 0, %s56
      %s73 = sphi 0, %s57
    $region4: #{tpu_custom_call.1} parent=1 // loop_header_branch
      %20 = sbr.rel (%p18) target = $region8
    $region5: #{tpu_custom_call.1} parent=1 // loop_body
      %s22 = ssub.s32 %s17, 1
      %s23 = ssub.s32 %s17, 2
      %s24 = sadd.s32 %s17, 1
      %s25 = ssub.s32 %s17, %s24
      %p26 = scmp.eq.s32.totalorder %s25, 0
      %s28 = sadd.s32 %s27, 1
      %s29 = scalar_select %p26, %s27, %s28
      %p32 = pneg %p26
      %p33 = scmp.eq.s32.totalorder %s17, 7
      %p34 = por %p32, %p33
      %p35 = scmp.ne.s32.totalorder %s27, %s30
      %p36 = scmp.eq.s32.totalorder %s17, 0
      %p37 = por %p35, %p36
      %p38 = scmp.ne.s32.totalorder %s27, %s30
      %p39 = scmp.eq.s32.totalorder %s22, 7
      %p40 = por %p38, %p39
      %p41 = scmp.ne.s32.totalorder %s30, %s31
      %p42 = scmp.eq.s32.totalorder %s22, 0
      %p43 = por %p41, %p42
      %p44 = scmp.ne.s32.totalorder %s30, %s31
      %p45 = scmp.eq.s32.totalorder %s23, 7
      %p46 = por %p44, %p45
      %p48 = scmp.ne.s32.totalorder %s31, %s47
      %p49 = scmp.eq.s32.totalorder %s23, 0
      %p50 = por %p48, %p49
      %s51 = ssub.s32 %s17, %s24
      %p52 = scmp.eq.s32.totalorder %s51, 0
      %s54 = sadd.s32 %s53, 1
      %s55 = scalar_select %p52, %s53, %s54
      %p58 = pneg %p52
      %p59 = scmp.eq.s32.totalorder %s17, 7
      %p60 = por %p58, %p59
      %p61 = scmp.ne.s32.totalorder %s53, %s56
      %p62 = scmp.eq.s32.totalorder %s17, 0
      %p63 = por %p61, %p62
      %p64 = scmp.ne.s32.totalorder %s53, %s56
      %p65 = scmp.eq.s32.totalorder %s22, 7
      %p66 = por %p64, %p65
      %p67 = scmp.ne.s32.totalorder %s56, %s57
      %p68 = scmp.eq.s32.totalorder %s22, 0
      %p69 = por %p67, %p68
      %p70 = scmp.ne.s32.totalorder %s56, %s57
      %p71 = scmp.eq.s32.totalorder %s23, 7
      %p72 = por %p70, %p71
      %p74 = scmp.ne.s32.totalorder %s57, %s73
      %p75 = scmp.eq.s32.totalorder %s23, 0
      %p76 = por %p74, %p75
      %p77 = scmp.le.s32.totalorder 1, %s17
      %p78 = scmp.lt.s32.totalorder %s17, 9
      %p79 = pnand %p77, %p78
      %p80 = pneg %p79
      // Predicated region
      $region9: #{tpu_custom_call.1} parent=5 // pred_check
        _
      $region10: #{tpu_custom_call.1} parent=5 // pred_check_branch
        %82 = sbr.rel (%p79) target = $region12
      $region11: #{tpu_custom_call.1} parent=5 // pred_region
        %s83 = ssub.s32 %s17, 1
      $region12: #{tpu_custom_call.1} parent=5 // pred_fallthru
        _
      %p84 = scmp.lt.s32.totalorder %s17, 8
      // Predicated region
      $region13: #{tpu_custom_call.1} parent=5 // pred_check
        %p85 = pneg %p84
      $region14: #{tpu_custom_call.1} parent=5 // pred_check_branch
        %87 = sbr.rel (%p85) target = $region16
      $region15: #{tpu_custom_call.1} parent=5 // pred_region
        // Predicated region
        $region17: #{tpu_custom_call.1} parent=15 // pred_check
          %p88 = pneg %p37
        $region18: #{tpu_custom_call.1} parent=15 // pred_check_branch
          %90 = sbr.rel (%p88) target = $region20
        $region19: #{tpu_custom_call.1} parent=15 // pred_region
          %s91 = sand.u32 %s27, 1
          %s92 = scalar_lea.sflag [#allocation6], %s91
          %s93 = sand.u32 %s27, 1
          %s94 = smul.addr %s93, 128
          %s95 = scalar_lea.vmem [#allocation5], %s94
          %s96 = smul.u32 2, %s17
          %98 = vsyncadd %s92, 0
          %s99 = smul.addr %s96, 8
          %s100 = smul.addr %s99, 8
          %s101 = scalar_lea.hbm %s2, %s100
          %s102 = sshll.u32 %s101, 4
          %s103 = int_to_ptr.hbm [resolvable:$true] %s102
          %s104 = sshll.u32 %s95, 4
          %s105 = int_to_ptr.vmem [resolvable:$true] %s104
          %110 = dma.hbm_to_vmem [thread:$0]  %s103, 2048, %s105, %s92, 1024, 1024, 64
        $region20: #{tpu_custom_call.1} parent=15 // pred_fallthru
          _
      $region16: #{tpu_custom_call.1} parent=5 // pred_fallthru
        _
      %p111 = scmp.le.s32.totalorder 1, %s17
      %p112 = scmp.lt.s32.totalorder %s17, 9
      %p113 = pnand %p111, %p112
      %p114 = pneg %p113
      // Predicated region
      $region21: #{tpu_custom_call.1} parent=5 // pred_check
        _
      $region22: #{tpu_custom_call.1} parent=5 // pred_check_branch
        %116 = sbr.rel (%p113) target = $region24
      $region23: #{tpu_custom_call.1} parent=5 // pred_region
        %s117 = ssub.s32 %s17, 1
        %s118 = sand.u32 %s30, 1
        %s119 = scalar_lea.sflag [#allocation6], %s118
        %s120 = sand.u32 %s30, 1
        %s121 = smul.addr %s120, 128
        %s122 = scalar_lea.vmem [#allocation5], %s121
        // Predicated region
        $region25: #{tpu_custom_call.1} parent=23 // pred_check
          %p123 = pneg %p43
        $region26: #{tpu_custom_call.1} parent=23 // pred_check_branch
          %125 = sbr.rel (%p123) target = $region28
        $region27: #{tpu_custom_call.1} parent=23 // pred_region
          %127 = dma.done %s119, 2048
        $region28: #{tpu_custom_call.1} parent=23 // pred_fallthru
          _
        %s128 = sand.u32 %s30, 1
        %s129 = scalar_lea.sflag [#allocation6], %s128
        %s130 = sand.u32 %s30, 1
        %s131 = smul.addr %s130, 128
        %s132 = scalar_lea.vmem [#allocation5], %s131
        %p133 = pneg %p43
        %p134 = pneg %p40
        %p135 = pneg %p69
        %p136 = pneg %p66
        %s137 = sand.u32 %s56, 1
        %s138 = scalar_lea.sflag [#allocation7], %s137
        %s139 = sand.u32 %s56, 1
        %s140 = smul.addr %s139, 128
        %s141 = scalar_lea.vmem [#allocation8], %s140
        %s142 = smul.u32 2, %s22
        %s143 = smul.u32 2, %s22
        %s144 = sld [smem:[#allocation3]]
        %s145 = sld [smem:[#allocation4]]
        %s146 = sadd.f32 %s144, %s145
        %v147 = vld [vmem:[%s122] sm:$0xff]
        %v148 = vld [vmem:[%s122 + $0x8] sm:$0xff]
        %v149 = vld [vmem:[%s122 + $0x10] sm:$0xff]
        %v150 = vld [vmem:[%s122 + $0x18] sm:$0xff]
        %v151 = vld [vmem:[%s122 + $0x20] sm:$0xff]
        %v152 = vld [vmem:[%s122 + $0x28] sm:$0xff]
        %v153 = vld [vmem:[%s122 + $0x30] sm:$0xff]
        %v154 = vld [vmem:[%s122 + $0x38] sm:$0xff]
        %v155 = vld [vmem:[%s122 + $0x40] sm:$0xff]
        %v156 = vld [vmem:[%s122 + $0x48] sm:$0xff]
        %v157 = vld [vmem:[%s122 + $0x50] sm:$0xff]
        %v158 = vld [vmem:[%s122 + $0x58] sm:$0xff]
        %v159 = vld [vmem:[%s122 + $0x60] sm:$0xff]
        %v160 = vld [vmem:[%s122 + $0x68] sm:$0xff]
        %v161 = vld [vmem:[%s122 + $0x70] sm:$0xff]
        %v162 = vld [vmem:[%s122 + $0x78] sm:$0xff]
        %v163 = vstv %s146
        %v164 = vmul.f32 %v163, %v147
        %v165 = vmul.f32 %v163, %v148
        %v166 = vmul.f32 %v163, %v149
        %v167 = vmul.f32 %v163, %v150
        %v168 = vmul.f32 %v163, %v151
        %v169 = vmul.f32 %v163, %v152
        %v170 = vmul.f32 %v163, %v153
        %v171 = vmul.f32 %v163, %v154
        %v172 = vmul.f32 %v163, %v155
        %v173 = vmul.f32 %v163, %v156
        %v174 = vmul.f32 %v163, %v157
        %v175 = vmul.f32 %v163, %v158
        %v176 = vmul.f32 %v163, %v159
        %v177 = vmul.f32 %v163, %v160
        %v178 = vmul.f32 %v163, %v161
        %v179 = vmul.f32 %v163, %v162
        %180 = vst [vmem:[%s141] sm:$0xff] %v164
        %181 = vst [vmem:[%s141 + $0x8] sm:$0xff] %v165
        %182 = vst [vmem:[%s141 + $0x10] sm:$0xff] %v166
        %183 = vst [vmem:[%s141 + $0x18] sm:$0xff] %v167
        %184 = vst [vmem:[%s141 + $0x20] sm:$0xff] %v168
        %185 = vst [vmem:[%s141 + $0x28] sm:$0xff] %v169
        %186 = vst [vmem:[%s141 + $0x30] sm:$0xff] %v170
        %187 = vst [vmem:[%s141 + $0x38] sm:$0xff] %v171
        %188 = vst [vmem:[%s141 + $0x40] sm:$0xff] %v172
        %189 = vst [vmem:[%s141 + $0x48] sm:$0xff] %v173
        %190 = vst [vmem:[%s141 + $0x50] sm:$0xff] %v174
        %191 = vst [vmem:[%s141 + $0x58] sm:$0xff] %v175
        %192 = vst [vmem:[%s141 + $0x60] sm:$0xff] %v176
        %193 = vst [vmem:[%s141 + $0x68] sm:$0xff] %v177
        %194 = vst [vmem:[%s141 + $0x70] sm:$0xff] %v178
        %195 = vst [vmem:[%s141 + $0x78] sm:$0xff] %v179
        %s196 = sand.u32 %s56, 1
        %s197 = scalar_lea.sflag [#allocation7], %s196
        %s198 = sand.u32 %s56, 1
        %s199 = smul.addr %s198, 128
        %s200 = scalar_lea.vmem [#allocation8], %s199
        // Predicated region
        $region29: #{tpu_custom_call.1} parent=23 // pred_check
          %p201 = pneg %p66
        $region30: #{tpu_custom_call.1} parent=23 // pred_check_branch
          %203 = sbr.rel (%p201) target = $region32
        $region31: #{tpu_custom_call.1} parent=23 // pred_region
          %s204 = smul.u32 2, %s22
          %206 = vsyncadd %s197, 0
          %s207 = smul.addr %s204, 8
          %s208 = smul.addr %s207, 8
          %s209 = scalar_lea.hbm %s3, %s208
          %s210 = sshll.u32 %s200, 4
          %s211 = int_to_ptr.vmem [resolvable:$true] %s210
          %s212 = sshll.u32 %s209, 4
          %s213 = int_to_ptr.hbm [resolvable:$true] %s212
          %218 = dma.vmem_to_hbm [thread:$0]  %s211, 2048, %s213, %s197, 1024, 1024, 64
        $region32: #{tpu_custom_call.1} parent=23 // pred_fallthru
          _
      $region24: #{tpu_custom_call.1} parent=5 // pred_fallthru
        _
      %p219 = scmp.le.s32.totalorder 2, %s17
      // Predicated region
      $region33: #{tpu_custom_call.1} parent=5 // pred_check
        %p220 = pneg %p219
      $region34: #{tpu_custom_call.1} parent=5 // pred_check_branch
        %222 = sbr.rel (%p220) target = $region36
      $region35: #{tpu_custom_call.1} parent=5 // pred_region
        %s223 = ssub.s32 %s17, 2
        // Predicated region
        $region37: #{tpu_custom_call.1} parent=35 // pred_check
          %p224 = pneg %p72
        $region38: #{tpu_custom_call.1} parent=35 // pred_check_branch
          %226 = sbr.rel (%p224) target = $region40
        $region39: #{tpu_custom_call.1} parent=35 // pred_region
          %s227 = sand.u32 %s57, 1
          %s228 = scalar_lea.sflag [#allocation7], %s227
          %s229 = sand.u32 %s57, 1
          %s230 = smul.addr %s229, 128
          %s231 = scalar_lea.vmem [#allocation8], %s230
          %233 = dma.done %s228, 2048
        $region40: #{tpu_custom_call.1} parent=35 // pred_fallthru
          _
      $region36: #{tpu_custom_call.1} parent=5 // pred_fallthru
        _
    $region6: #{tpu_custom_call.1} parent=1 // loop_footer
      %s21 = sadd.s32 1, %s17
    $region7: #{tpu_custom_call.1} parent=1 // loop_footer_branch
      %16 = sbr.rel target = $region3
    $region8: #{tpu_custom_call.1} parent=1 // loop_exit
      _
    %234 = vsyncpa [#allocation6], 1
    %s235 = scalar_lea.sflag [#allocation6], 1
    %236 = vsyncpa %s235, 1
    %237 = vsyncpa [#allocation7], 1
    %s238 = scalar_lea.sflag [#allocation7], 1
    %239 = vsyncpa %s238, 1

</llo_original>
